<compile_context>
chip_gen: v6e
topology: v6e:2x2x1
jax: 0.10.0
libtpu: 0.0.40
codegen_flags: <defaults>
</compile_context>

<pallas_src>
import functools

import jax
import jax.numpy as jnp
from jax.experimental import pallas as pl
from jax.experimental.pallas import tpu as pltpu


def generator2_kernel(x_ref, noise_ref, wf_ref, bf_ref, w1z_ref, w2_ref,
                      out_ref, mean_sc, std_sc, hx_sc):
    C = w2_ref.shape[0]

    # Hoisted x-only work: one fused matmul (C -> 3C) computed only at the
    # first repeat step of each row tile, then reused from VMEM scratch.
    @pl.when(pl.program_id(1) == 0)
    def _():
        fused = jnp.dot(x_ref[...], wf_ref[...],
                        preferred_element_type=jnp.float32) + bf_ref[...]
        mean_sc[...] = fused[:, :C]                       # mean_layer(x)
        std_sc[...] = jnp.maximum(fused[:, C:2 * C], 0.0)  # relu(std_layer(x))
        hx_sc[...] = fused[:, 2 * C:]                     # x-half of mlp layer 1

    # Per-repeat work: only these dots genuinely depend on the tiled rows.
    z = mean_sc[...] + std_sc[...] * noise_ref[...]
    h = jnp.maximum(
        hx_sc[...] + jnp.dot(z, w1z_ref[...],
                             preferred_element_type=jnp.float32),
        0.0)
    out = jnp.maximum(
        jnp.dot(h, w2_ref[...], preferred_element_type=jnp.float32), 0.0)
    out_ref[...] = out.astype(out_ref.dtype)


@functools.partial(jax.jit, static_argnames=("repeat_time", "tn"))
def generator2_forward(params, x, label, noise, repeat_time=16, tn=None):
    N, C = x.shape
    M = repeat_time * N
    if tn is None:
        tn = N                       # rows per block (one repeat-tile of x)
    assert N % tn == 0 and tn % 8 == 0, "row tile must be a multiple of 8"
    n_tiles = N // tn

    x = x.astype(jnp.float32)
    noise = noise.astype(jnp.float32)

    # Weight prep (layout plumbing, not compute):
    #   torch Linear weight is (out, in); transpose to (in, out) so the kernel
    #   does plain rows @ W on the MXU.  Fuse the three x-consuming weights
    #   into one (C, 3C) matrix: [mean | std | mlp1_x-half].
    wm = params["w_mean"].T                     # (C, C)
    ws = params["w_std"].T                      # (C, C)
    w1 = params["w_mlp1"]                       # (C, 2C) torch (out, in)
    w1x = w1[:, :C].T                           # (C, C)  multiplies x-half
    w1z = w1[:, C:].T                           # (C, C)  multiplies z-half
    w2 = params["w_mlp2"].T                     # (C, C)
    w_fused = jnp.concatenate([wm, ws, w1x], axis=1)              # (C, 3C)
    b_fused = jnp.concatenate(
        [params["b_mean"], params["b_std"], jnp.zeros((C,), jnp.float32)]
    ).reshape(1, 3 * C)                                           # (1, 3C)

    # Grid: (row tiles of x, repeat_time).
    #  - outer axis "parallel": independent row tiles (v7x megacore).
    #  - inner axis "arbitrary": carries the hoisted per-tile scratch.
    # x index_map ignores the repeat index -> fetched once per row tile.
    # noise/out row block for (n, r) starts at row r*N + n*tn, i.e. block
    # index r*n_tiles + n.
    # VMEM footprint here is tiny (weights ~5*C^2*4B + a few (tn,C) blocks);
    # for large C derive tn / weight streaming from
    # pltpu.get_tpu_info().vmem_capacity_bytes (v7x has 64 MiB, v5e/v6e 128).
    out = pl.pallas_call(
        generator2_kernel,
        out_shape=jax.ShapeDtypeStruct((M, C), jnp.float32),
        grid=(n_tiles, repeat_time),
        in_specs=[
            pl.BlockSpec((tn, C), lambda n, r: (n, 0)),                  # x
            pl.BlockSpec((tn, C), lambda n, r: (r * n_tiles + n, 0)),    # eps
            pl.BlockSpec((C, 3 * C), lambda n, r: (0, 0)),               # W_fused
            pl.BlockSpec((1, 3 * C), lambda n, r: (0, 0)),               # b_fused
            pl.BlockSpec((C, C), lambda n, r: (0, 0)),                   # W1z
            pl.BlockSpec((C, C), lambda n, r: (0, 0)),                   # W2
        ],
        out_specs=pl.BlockSpec((tn, C), lambda n, r: (r * n_tiles + n, 0)),
        scratch_shapes=[
            pltpu.VMEM((tn, C), jnp.float32),   # mean
            pltpu.VMEM((tn, C), jnp.float32),   # relu(std)
            pltpu.VMEM((tn, C), jnp.float32),   # x @ W1x
        ],
        compiler_params=pltpu.CompilerParams(
            dimension_semantics=("parallel", "arbitrary")),
    )(x, noise, w_fused, b_fused, w1z, w2)

    # torch label.repeat(repeat_time) == whole-tensor tiling (glue, not compute)
    label_rep = jnp.tile(label, (repeat_time,))
    return out, label_rep


def init_params(key, C):
    ks = jax.random.split(key, 6)
    bound = 1.0 / float(C) ** 0.5
    # mean_layer / std_layer: default nn.Linear-style uniform init
    w_mean = jax.random.uniform(ks[0], (C, C), jnp.float32, -bound, bound)
    b_mean = jax.random.uniform(ks[1], (C,), jnp.float32, -bound, bound)
    w_std = jax.random.uniform(ks[2], (C, C), jnp.float32, -bound, bound)
    b_std = jax.random.uniform(ks[3], (C,), jnp.float32, -bound, bound)
    # mlp: weight = eye + N(0, 0.02), no bias (matches init_weights in module)
    w_mlp1 = (jnp.eye(C, 2 * C, dtype=jnp.float32)
              + 0.02 * jax.random.normal(ks[4], (C, 2 * C), jnp.float32))
    w_mlp2 = (jnp.eye(C, C, dtype=jnp.float32)
              + 0.02 * jax.random.normal(ks[5], (C, C), jnp.float32))
    return dict(w_mean=w_mean, b_mean=b_mean, w_std=w_std, b_std=b_std,
                w_mlp1=w_mlp1, w_mlp2=w_mlp2)


def reference_forward(params, x, label, noise, repeat_time=16):
    # Pure-JAX reference with identical semantics (for correctness checking).
    x_rep = jnp.tile(x, (repeat_time, 1))
    mean = x_rep @ params["w_mean"].T + params["b_mean"]
    std = jax.nn.relu(x_rep @ params["w_std"].T + params["b_std"])
    z = mean + std * noise
    h = jnp.concatenate([x_rep, z], axis=1)
    h = jax.nn.relu(h @ params["w_mlp1"].T)
    out = jax.nn.relu(h @ params["w_mlp2"].T)
    return out, jnp.tile(label, (repeat_time,))


if __name__ == "__main__":
    N, C, repeat_time = 8, 32, 16
    key = jax.random.PRNGKey(0)
    k_param, k_x, k_lbl, k_noise = jax.random.split(key, 4)

    params = init_params(k_param, C)
    x = jax.random.normal(k_x, (N, C), jnp.float32)
    label = jax.random.randint(k_lbl, (N,), 0, 10, jnp.int32)
    noise = jax.random.normal(k_noise, (repeat_time * N, C), jnp.float32)

    out, label_rep = generator2_forward(params, x, label, noise,
                                        repeat_time=repeat_time)
    out = jax.block_until_ready(out)
    label_rep = jax.block_until_ready(label_rep)

    ref_out, ref_label = reference_forward(params, x, label, noise, repeat_time)
    assert out.shape == (repeat_time * N, C)
    assert label_rep.shape == (repeat_time * N,)
    assert jnp.allclose(out, ref_out, atol=1e-4, rtol=1e-4)
    assert jnp.array_equal(label_rep, ref_label)

    print("KERNEL_OK")
</pallas_src>

<mosaic_0001>
module attributes {stable_mosaic.version = 11 : i64} {
  func.func @generator2_kernel(%arg0: i32, %arg1: i32, %arg2: memref<8x32xf32, #tpu.memory_space<vmem>>, %arg3: memref<8x32xf32, #tpu.memory_space<vmem>>, %arg4: memref<32x96xf32, #tpu.memory_space<vmem>>, %arg5: memref<1x96xf32, #tpu.memory_space<vmem>>, %arg6: memref<32x32xf32, #tpu.memory_space<vmem>>, %arg7: memref<32x32xf32, #tpu.memory_space<vmem>>, %arg8: memref<8x32xf32, #tpu.memory_space<vmem>>, %arg9: memref<8x32xf32, #tpu.memory_space<vmem>>, %arg10: memref<8x32xf32, #tpu.memory_space<vmem>>, %arg11: memref<8x32xf32, #tpu.memory_space<vmem>>) attributes {dimension_semantics = [#tpu.dimension_semantics<parallel>, #tpu.dimension_semantics<arbitrary>], iteration_bounds = array<i64: 1, 16>, scalar_prefetch = 0 : i64, scratch_operands = 3 : i64, tpu.core_type = #tpu.core_type<tc>, window_params = [{transform_indices = @transform_0, window_bounds = array<i64: 8, 32>}, {transform_indices = @transform_1, window_bounds = array<i64: 8, 32>}, {pipeline_mode = #tpu.pipeline_mode<synchronous>, transform_indices = @transform_2, window_bounds = array<i64: 32, 96>}, {pipeline_mode = #tpu.pipeline_mode<synchronous>, transform_indices = @transform_3, window_bounds = array<i64: 1, 96>}, {pipeline_mode = #tpu.pipeline_mode<synchronous>, transform_indices = @transform_4, window_bounds = array<i64: 32, 32>}, {pipeline_mode = #tpu.pipeline_mode<synchronous>, transform_indices = @transform_5, window_bounds = array<i64: 32, 32>}, {transform_indices = @transform_6, window_bounds = array<i64: 8, 32>}]} {
    %c0_i32 = arith.constant 0 : i32
    %0 = arith.cmpi eq, %arg1, %c0_i32 : i32
    %1 = arith.extui %0 : i1 to i32
    %c0_i32_0 = arith.constant 0 : i32
    %2 = arith.cmpi ne, %1, %c0_i32_0 : i32
    scf.if %2 {
      %c0_17 = arith.constant 0 : index
      %c0_18 = arith.constant 0 : index
      %19 = vector.load %arg2[%c0_17, %c0_18] : memref<8x32xf32, #tpu.memory_space<vmem>>, vector<8x32xf32>
      %c0_19 = arith.constant 0 : index
      %c0_20 = arith.constant 0 : index
      %20 = vector.load %arg4[%c0_19, %c0_20] : memref<32x96xf32, #tpu.memory_space<vmem>>, vector<32x96xf32>
      %cst_21 = arith.constant dense<0.000000e+00> : vector<8x96xf32>
      %21 = tpu.matmul %19, %20, %cst_21 {dimension_numbers = #tpu.dot_dimension_numbers<[1], [0], [0], [1], [0, 0, 1, 1], [], []>} : vector<8x32xf32>, vector<32x96xf32>, vector<8x96xf32> -> vector<8x96xf32>
      %c0_22 = arith.constant 0 : index
      %c0_23 = arith.constant 0 : index
      %22 = vector.load %arg5[%c0_22, %c0_23] : memref<1x96xf32, #tpu.memory_space<vmem>>, vector<1x96xf32>
      %23 = vector.broadcast %22 : vector<1x96xf32> to vector<8x96xf32>
      %24 = arith.addf %21, %23 : vector<8x96xf32>
      %25 = vector.extract_strided_slice %24 {offsets = [0, 0], sizes = [8, 32], strides = [1, 1]} : vector<8x96xf32> to vector<8x32xf32>
      %c0_24 = arith.constant 0 : index
      %c0_25 = arith.constant 0 : index
      %26 = vector.load %arg9[%c0_24, %c0_25] : memref<8x32xf32, #tpu.memory_space<vmem>>, vector<8x32xf32>
      tpu.vector_store %arg9[%c0_24, %c0_25], %25 {strides = array<i32>} : memref<8x32xf32, #tpu.memory_space<vmem>>, vector<8x32xf32>,
      %27 = vector.extract_strided_slice %24 {offsets = [0, 32], sizes = [8, 32], strides = [1, 1]} : vector<8x96xf32> to vector<8x32xf32>
      %cst_26 = arith.constant 0.000000e+00 : f32
      %28 = vector.broadcast %cst_26 : f32 to vector<8x32xf32>
      %29 = arith.maximumf %27, %28 : vector<8x32xf32>
      %c0_27 = arith.constant 0 : index
      %c0_28 = arith.constant 0 : index
      %30 = vector.load %arg10[%c0_27, %c0_28] : memref<8x32xf32, #tpu.memory_space<vmem>>, vector<8x32xf32>
      tpu.vector_store %arg10[%c0_27, %c0_28], %29 {strides = array<i32>} : memref<8x32xf32, #tpu.memory_space<vmem>>, vector<8x32xf32>,
      %31 = vector.extract_strided_slice %24 {offsets = [0, 64], sizes = [8, 32], strides = [1, 1]} : vector<8x96xf32> to vector<8x32xf32>
      %c0_29 = arith.constant 0 : index
      %c0_30 = arith.constant 0 : index
      %32 = vector.load %arg11[%c0_29, %c0_30] : memref<8x32xf32, #tpu.memory_space<vmem>>, vector<8x32xf32>
      tpu.vector_store %arg11[%c0_29, %c0_30], %31 {strides = array<i32>} : memref<8x32xf32, #tpu.memory_space<vmem>>, vector<8x32xf32>,
    } else {
    }
    %c0 = arith.constant 0 : index
    %c0_1 = arith.constant 0 : index
    %3 = vector.load %arg9[%c0, %c0_1] : memref<8x32xf32, #tpu.memory_space<vmem>>, vector<8x32xf32>
    %c0_2 = arith.constant 0 : index
    %c0_3 = arith.constant 0 : index
    %4 = vector.load %arg10[%c0_2, %c0_3] : memref<8x32xf32, #tpu.memory_space<vmem>>, vector<8x32xf32>
    %c0_4 = arith.constant 0 : index
    %c0_5 = arith.constant 0 : index
    %5 = vector.load %arg3[%c0_4, %c0_5] : memref<8x32xf32, #tpu.memory_space<vmem>>, vector<8x32xf32>
    %6 = arith.mulf %4, %5 : vector<8x32xf32>
    %7 = arith.addf %3, %6 : vector<8x32xf32>
    %c0_6 = arith.constant 0 : index
    %c0_7 = arith.constant 0 : index
    %8 = vector.load %arg11[%c0_6, %c0_7] : memref<8x32xf32, #tpu.memory_space<vmem>>, vector<8x32xf32>
    %c0_8 = arith.constant 0 : index
    %c0_9 = arith.constant 0 : index
    %9 = vector.load %arg6[%c0_8, %c0_9] : memref<32x32xf32, #tpu.memory_space<vmem>>, vector<32x32xf32>
    %cst = arith.constant dense<0.000000e+00> : vector<8x32xf32>
    %10 = tpu.matmul %7, %9, %cst {dimension_numbers = #tpu.dot_dimension_numbers<[1], [0], [0], [1], [0, 0, 1, 1], [], []>} : vector<8x32xf32>, vector<32x32xf32>, vector<8x32xf32> -> vector<8x32xf32>
    %11 = arith.addf %8, %10 : vector<8x32xf32>
    %cst_10 = arith.constant 0.000000e+00 : f32
    %12 = vector.broadcast %cst_10 : f32 to vector<8x32xf32>
    %13 = arith.maximumf %11, %12 : vector<8x32xf32>
    %c0_11 = arith.constant 0 : index
    %c0_12 = arith.constant 0 : index
    %14 = vector.load %arg7[%c0_11, %c0_12] : memref<32x32xf32, #tpu.memory_space<vmem>>, vector<32x32xf32>
    %cst_13 = arith.constant dense<0.000000e+00> : vector<8x32xf32>
    %15 = tpu.matmul %13, %14, %cst_13 {dimension_numbers = #tpu.dot_dimension_numbers<[1], [0], [0], [1], [0, 0, 1, 1], [], []>} : vector<8x32xf32>, vector<32x32xf32>, vector<8x32xf32> -> vector<8x32xf32>
    %cst_14 = arith.constant 0.000000e+00 : f32
    %16 = vector.broadcast %cst_14 : f32 to vector<8x32xf32>
    %17 = arith.maximumf %15, %16 : vector<8x32xf32>
    %c0_15 = arith.constant 0 : index
    %c0_16 = arith.constant 0 : index
    %18 = vector.load %arg8[%c0_15, %c0_16] : memref<8x32xf32, #tpu.memory_space<vmem>>, vector<8x32xf32>
    tpu.vector_store %arg8[%c0_15, %c0_16], %17 {strides = array<i32>} : memref<8x32xf32, #tpu.memory_space<vmem>>, vector<8x32xf32>,
    return
  }
  func.func @transform_0(%arg0: i32, %arg1: i32) -> (i32, i32) {
    %c0_i32 = arith.constant 0 : i32
    %c0_i32_0 = arith.constant 0 : i32
    return %arg0, %c0_i32 : i32, i32
  }
  func.func @transform_1(%arg0: i32, %arg1: i32) -> (i32, i32) {
    %c1_i32 = arith.constant 1 : i32
    %0 = arith.muli %arg1, %c1_i32 : i32
    %1 = arith.addi %0, %arg0 : i32
    %c0_i32 = arith.constant 0 : i32
    %c0_i32_0 = arith.constant 0 : i32
    return %1, %c0_i32 : i32, i32
  }
  func.func @transform_2(%arg0: i32, %arg1: i32) -> (i32, i32) {
    %c0_i32 = arith.constant 0 : i32
    %c0_i32_0 = arith.constant 0 : i32
    %c0_i32_1 = arith.constant 0 : i32
    return %c0_i32, %c0_i32_0 : i32, i32
  }
  func.func @transform_3(%arg0: i32, %arg1: i32) -> (i32, i32) {
    %c0_i32 = arith.constant 0 : i32
    %c0_i32_0 = arith.constant 0 : i32
    %c0_i32_1 = arith.constant 0 : i32
    return %c0_i32, %c0_i32_0 : i32, i32
  }
  func.func @transform_4(%arg0: i32, %arg1: i32) -> (i32, i32) {
    %c0_i32 = arith.constant 0 : i32
    %c0_i32_0 = arith.constant 0 : i32
    %c0_i32_1 = arith.constant 0 : i32
    return %c0_i32, %c0_i32_0 : i32, i32
  }
  func.func @transform_5(%arg0: i32, %arg1: i32) -> (i32, i32) {
    %c0_i32 = arith.constant 0 : i32
    %c0_i32_0 = arith.constant 0 : i32
    %c0_i32_1 = arith.constant 0 : i32
    return %c0_i32, %c0_i32_0 : i32, i32
  }
  func.func @transform_6(%arg0: i32, %arg1: i32) -> (i32, i32) {
    %c1_i32 = arith.constant 1 : i32
    %0 = arith.muli %arg1, %c1_i32 : i32
    %1 = arith.addi %0, %arg0 : i32
    %c0_i32 = arith.constant 0 : i32
    %c0_i32_0 = arith.constant 0 : i32
    return %1, %c0_i32 : i32, i32
  }
}

</mosaic_0001>

<llo_original>
// kernel: tile.8
$region0: #{tile.8}
  #allocation0 [shape = 's32[1]{0}', space=sflag, size = 0x4, scoped, tag = 'scoped memory for tile.8']
  %s0 = inlined_call_operand.vmem [shape: s32[8], index: 0, kind: input, shape index: {}]
  %s1 = inlined_call_operand.vmem [shape: s32[16,8], index: 1, kind: output, shape index: {}]
  // Predicated region
  $region2: #{tile.8} parent=0 // pred_check
    _
  $region3: #{tile.8} parent=0 // pred_check_branch
    %3 = sbr.rel (0) target = $region5
  $region4: #{tile.8} parent=0 // pred_region
    _
  $region5: #{tile.8} parent=0 // pred_fallthru
    _
  %v4 = vld [vmem:[%s0] ss:$0 sm:$0xff]
  %5 = vst [vmem:[%s1] sm:$0xff] %v4
  %s6 = scalar_lea.vmem %s1, 8
  %7 = vst [vmem:[%s6] sm:$0xff] %v4

// kernel: tile.9
$region0: #{tile.9}
  %s0 = inlined_call_operand.vmem [shape: s32[16,8], index: 0, kind: input, shape index: {}]
  %s1 = inlined_call_operand.hbm [shape: s32[128], index: 1, kind: output, shape index: {}]
  $region1: #{tile.9} parent=0
    #allocation0 [shape = 'u8[512]{0}', space=vmem, size = 0x400, scoped, tag = 'operand span for operand 1']
    #allocation1 [shape = 's32[1]{0}', space=sflag, size = 0x4, scoped, tag = 'scoped memory for tile.9']
    #allocation2 [shape = 'u8[4096]{0}', space=vmem, size = 0x1000, scoped, tag = 'scoped mem for output reshape']
    %2 = vsyncpa [#allocation1], 0
    %v3 = vld [vmem:[%s0] sm:$0x1]
    %vm4 = vcmask 64512
    %5 = vst.msk [vmem:[#allocation2] sm:$0x1] %vm4, %v3
    %s6 = scalar_lea.vmem %s0, 15
    %v7 = vld [vmem:[%s6] sm:$0x1]
    %8 = vrot.lane.b32.xlu0 %v7, 120
    %v9 = vpop.permute.xlu0 %8
    %vm10 = vcmask 1048512
    %11 = vst.msk [vmem:[#allocation2] sm:$0x1] %vm10, %v9
    %s12 = scalar_lea.vmem %s0, 14
    %v13 = vld [vmem:[%s12] sm:$0x1]
    %14 = vrot.lane.b32.xlu0 %v13, 112
    %v15 = vpop.permute.xlu0 %14
    %vm16 = vcmask 982912
    %17 = vst.msk [vmem:[#allocation2] sm:$0x1] %vm16, %v15
    %s18 = scalar_lea.vmem %s0, 13
    %v19 = vld [vmem:[%s18] sm:$0x1]
    %20 = vrot.lane.b32.xlu0 %v19, 104
    %v21 = vpop.permute.xlu0 %20
    %vm22 = vcmask 917312
    %23 = vst.msk [vmem:[#allocation2] sm:$0x1] %vm22, %v21
    %s24 = scalar_lea.vmem %s0, 12
    %v25 = vld [vmem:[%s24] sm:$0x1]
    %26 = vrot.lane.b32.xlu0 %v25, 96
    %v27 = vpop.permute.xlu0 %26
    %vm28 = vcmask 851712
    %29 = vst.msk [vmem:[#allocation2] sm:$0x1] %vm28, %v27
    %s30 = scalar_lea.vmem %s0, 11
    %v31 = vld [vmem:[%s30] sm:$0x1]
    %32 = vrot.lane.b32.xlu0 %v31, 88
    %v33 = vpop.permute.xlu0 %32
    %vm34 = vcmask 786112
    %35 = vst.msk [vmem:[#allocation2] sm:$0x1] %vm34, %v33
    %s36 = scalar_lea.vmem %s0, 10
    %v37 = vld [vmem:[%s36] sm:$0x1]
    %38 = vrot.lane.b32.xlu0 %v37, 80
    %v39 = vpop.permute.xlu0 %38
    %vm40 = vcmask 720512
    %41 = vst.msk [vmem:[#allocation2] sm:$0x1] %vm40, %v39
    %s42 = scalar_lea.vmem %s0, 9
    %v43 = vld [vmem:[%s42] sm:$0x1]
    %44 = vrot.lane.b32.xlu0 %v43, 72
    %v45 = vpop.permute.xlu0 %44
    %vm46 = vcmask 654912
    %47 = vst.msk [vmem:[#allocation2] sm:$0x1] %vm46, %v45
    %s48 = scalar_lea.vmem %s0, 8
    %v49 = vld [vmem:[%s48] sm:$0x1]
    %50 = vrot.lane.b32.xlu0 %v49, 64
    %v51 = vpop.permute.xlu0 %50
    %vm52 = vcmask 589312
    %53 = vst.msk [vmem:[#allocation2] sm:$0x1] %vm52, %v51
    %s54 = scalar_lea.vmem %s0, 7
    %v55 = vld [vmem:[%s54] sm:$0x1]
    %56 = vrot.lane.b32.xlu0 %v55, 56
    %v57 = vpop.permute.xlu0 %56
    %vm58 = vcmask 523712
    %59 = vst.msk [vmem:[#allocation2] sm:$0x1] %vm58, %v57
    %s60 = scalar_lea.vmem %s0, 6
    %v61 = vld [vmem:[%s60] sm:$0x1]
    %62 = vrot.lane.b32.xlu0 %v61, 48
    %v63 = vpop.permute.xlu0 %62
    %vm64 = vcmask 458112
    %65 = vst.msk [vmem:[#allocation2] sm:$0x1] %vm64, %v63
    %s66 = scalar_lea.vmem %s0, 5
    %v67 = vld [vmem:[%s66] sm:$0x1]
    %68 = vrot.lane.b32.xlu0 %v67, 40
    %v69 = vpop.permute.xlu0 %68
    %vm70 = vcmask 392512
    %71 = vst.msk [vmem:[#allocation2] sm:$0x1] %vm70, %v69
    %s72 = scalar_lea.vmem %s0, 4
    %v73 = vld [vmem:[%s72] sm:$0x1]
    %74 = vrot.lane.b32.xlu0 %v73, 32
    %v75 = vpop.permute.xlu0 %74
    %vm76 = vcmask 326912
    %77 = vst.msk [vmem:[#allocation2] sm:$0x1] %vm76, %v75
    %s78 = scalar_lea.vmem %s0, 3
    %v79 = vld [vmem:[%s78] sm:$0x1]
    %80 = vrot.lane.b32.xlu0 %v79, 24
    %v81 = vpop.permute.xlu0 %80
    %vm82 = vcmask 261312
    %83 = vst.msk [vmem:[#allocation2] sm:$0x1] %vm82, %v81
    %s84 = scalar_lea.vmem %s0, 2
    %v85 = vld [vmem:[%s84] sm:$0x1]
    %86 = vrot.lane.b32.xlu0 %v85, 16
    %v87 = vpop.permute.xlu0 %86
    %vm88 = vcmask 195712
    %89 = vst.msk [vmem:[#allocation2] sm:$0x1] %vm88, %v87
    %s90 = scalar_lea.vmem %s0, 1
    %v91 = vld [vmem:[%s90] sm:$0x1]
    %92 = vrot.lane.b32.xlu0 %v91, 8
    %v93 = vpop.permute.xlu0 %92
    %vm94 = vcmask 130112
    %95 = vst.msk [vmem:[#allocation2] sm:$0x1] %vm94, %v93
    %s97 = sshll.u32 1, 1
    %s98 = ssub.s32 %s97, 1
    %v100 = vld [vmem:[#allocation2] sm:%s98]
    %s101 = sshll.u32 1, 1
    %s102 = ssub.s32 %s101, 1
    %103 = vst [vmem:[#allocation0] sm:%s102] %v100
    %s105 = ssub.s32 16, 16
    %106 = vsyncadd [#allocation1], %s105
    %s108 = sshll.u32 [#allocation0], 4
    %s109 = int_to_ptr.vmem [resolvable:$true] %s108
    %111 = dma.vmem_to_hbm [thread:$0]  %s109, 16, %s1, [#allocation1]
    %112 = dma.done [#allocation1], 16
    %113 = vsyncpa [#allocation1], 1

// kernel: generator2_forward.1
$region0: #{generator2_forward.1}
  #allocation0 [shape = 'u32[]', space=smem, size = 0x4, offset = 0x4, fixed_abs, tag = 'smem constant byte address 0x4 - core index']
  #allocation1 [shape = 'u32[144,128]{1,0:T(1,128)}', space=vmem, size = 0x12000, scoped, tag = 'internal scratch']
  #allocation2 [shape = 'f32[8,32]{1,0:T(8,128)}', space=vmem, size = 0x1000, scoped, tag = 'scratch operand']
  #allocation3 [shape = 'f32[8,32]{1,0:T(8,128)}', space=vmem, size = 0x1000, scoped, tag = 'scratch operand']
  #allocation4 [shape = 'f32[8,32]{1,0:T(8,128)}', space=vmem, size = 0x1000, scoped, tag = 'scratch operand']
  %s0 = inlined_call_operand.vmem [shape: f32[8,32], index: 0, kind: input, shape index: {}]
  %s1 = inlined_call_operand.vmem [shape: f32[128,32], index: 1, kind: input, shape index: {}]
  %s2 = inlined_call_operand.vmem [shape: f32[32,96], index: 2, kind: input, shape index: {}]
  %s3 = inlined_call_operand.vmem [shape: f32[1,96], index: 3, kind: input, shape index: {}]
  %s4 = inlined_call_operand.vmem [shape: f32[32,32], index: 4, kind: input, shape index: {}]
  %s5 = inlined_call_operand.vmem [shape: f32[32,32], index: 5, kind: input, shape index: {}]
  %s6 = inlined_call_operand.vmem [shape: f32[128,32], index: 6, kind: output, shape index: {}]
  %s7 = sld [smem:[#allocation0]]
  $region61: #{generator2_forward.1} parent=0
    _
  %s9 = ssub.s32 1, %s7
  %s10 = scalar_select 0, %s9, %s7
  loop: start=0, step=1, limit=18
  $region2: #{generator2_forward.1} parent=0 // loop_pre_header
    _
  $region3: #{generator2_forward.1} parent=0 // loop_header
    %s12 = sphi 0, %s16
    %p13 = scmp.ge.s32.totalorder %s12, 18
    %s19 = sphi 0, %s31
    %s20 = sphi 0, %s27
    %s21 = sphi 0, %s19
    %s22 = sphi 0, %s20
    %s23 = sphi 0, %s21
    %s24 = sphi 0, %s22
    %s34 = sphi 0, %s36
    %s37 = sphi 0, %s34
    %s38 = sphi 0, %s37
    %s54 = sphi 0, %s38
    %s62 = sphi 0, %s64
    %s65 = sphi 0, %s62
    %s66 = sphi 0, %s65
    %s82 = sphi 0, %s66
    %s86 = sphi 0, %s86
    %s88 = sphi 0, %s86
    %s89 = sphi 0, %s88
    %s103 = sphi 0, %s89
    %s107 = sphi 0, %s107
    %s109 = sphi 0, %s107
    %s110 = sphi 0, %s109
    %s124 = sphi 0, %s110
    %s128 = sphi 0, %s128
    %s130 = sphi 0, %s128
    %s131 = sphi 0, %s130
    %s145 = sphi 0, %s131
    %s149 = sphi 0, %s149
    %s151 = sphi 0, %s149
    %s152 = sphi 0, %s151
    %s166 = sphi 0, %s152
    %s174 = sphi 0, %s176
    %s177 = sphi 0, %s174
    %s178 = sphi 0, %s177
    %s194 = sphi 0, %s178
  $region4: #{generator2_forward.1} parent=0 // loop_header_branch
    %15 = sbr.rel (%p13) target = $region8
  $region5: #{generator2_forward.1} parent=0 // loop_body
    %s17 = ssub.s32 %s12, 1
    %s18 = ssub.s32 %s12, 2
    %s25 = sadd.s32 1, %s20
    %p26 = scmp.ge.s32.totalorder %s25, 16
    %s27 = scalar_select %p26, 0, %s25
    %s28 = sadd.s32 1, %s19
    %s29 = scalar_select %p26, %s28, %s19
    %p30 = scmp.ge.s32.totalorder %s29, 1
    %s31 = scalar_select %p30, 0, %s29
    %s32 = ssub.s32 %s19, %s31
    %p33 = scmp.eq.s32.totalorder %s32, 0
    %s35 = sadd.s32 %s34, 1
    %s36 = scalar_select %p33, %s34, %s35
    %p39 = pneg %p33
    %p40 = scmp.eq.s32.totalorder %s12, 15
    %p41 = por %p39, %p40
    %p42 = scmp.ne.s32.totalorder %s34, %s37
    %p43 = scmp.eq.s32.totalorder %s12, 0
    %p44 = por %p42, %p43
    %p45 = scmp.ne.s32.totalorder %s34, %s37
    %p46 = scmp.eq.s32.totalorder %s17, 15
    %p47 = por %p45, %p46
    %p48 = scmp.ne.s32.totalorder %s37, %s38
    %p49 = scmp.eq.s32.totalorder %s17, 0
    %p50 = por %p48, %p49
    %p51 = scmp.ne.s32.totalorder %s37, %s38
    %p52 = scmp.eq.s32.totalorder %s18, 15
    %p53 = por %p51, %p52
    %p55 = scmp.ne.s32.totalorder %s38, %s54
    %p56 = scmp.eq.s32.totalorder %s18, 0
    %p57 = por %p55, %p56
    %s58 = sadd.s32 %s20, %s19
    %s59 = sadd.s32 %s27, %s31
    %s60 = ssub.s32 %s58, %s59
    %p61 = scmp.eq.s32.totalorder %s60, 0
    %s63 = sadd.s32 %s62, 1
    %s64 = scalar_select %p61, %s62, %s63
    %p67 = pneg %p61
    %p68 = scmp.eq.s32.totalorder %s12, 15
    %p69 = por %p67, %p68
    %p70 = scmp.ne.s32.totalorder %s62, %s65
    %p71 = scmp.eq.s32.totalorder %s12, 0
    %p72 = por %p70, %p71
    %p73 = scmp.ne.s32.totalorder %s62, %s65
    %p74 = scmp.eq.s32.totalorder %s17, 15
    %p75 = por %p73, %p74
    %p76 = scmp.ne.s32.totalorder %s65, %s66
    %p77 = scmp.eq.s32.totalorder %s17, 0
    %p78 = por %p76, %p77
    %p79 = scmp.ne.s32.totalorder %s65, %s66
    %p80 = scmp.eq.s32.totalorder %s18, 15
    %p81 = por %p79, %p80
    %p83 = scmp.ne.s32.totalorder %s66, %s82
    %p84 = scmp.eq.s32.totalorder %s18, 0
    %p85 = por %p83, %p84
    %s87 = sadd.s32 %s86, 1
    %p90 = scmp.eq.s32.totalorder %s12, 15
    %p91 = scmp.ne.s32.totalorder %s86, %s88
    %p92 = scmp.eq.s32.totalorder %s12, 0
    %p93 = por %p91, %p92
    %p94 = scmp.ne.s32.totalorder %s86, %s88
    %p95 = scmp.eq.s32.totalorder %s17, 15
    %p96 = por %p94, %p95
    %p97 = scmp.ne.s32.totalorder %s88, %s89
    %p98 = scmp.eq.s32.totalorder %s17, 0
    %p99 = por %p97, %p98
    %p100 = scmp.ne.s32.totalorder %s88, %s89
    %p101 = scmp.eq.s32.totalorder %s18, 15
    %p102 = por %p100, %p101
    %p104 = scmp.ne.s32.totalorder %s89, %s103
    %p105 = scmp.eq.s32.totalorder %s18, 0
    %p106 = por %p104, %p105
    %s108 = sadd.s32 %s107, 1
    %p111 = scmp.eq.s32.totalorder %s12, 15
    %p112 = scmp.ne.s32.totalorder %s107, %s109
    %p113 = scmp.eq.s32.totalorder %s12, 0
    %p114 = por %p112, %p113
    %p115 = scmp.ne.s32.totalorder %s107, %s109
    %p116 = scmp.eq.s32.totalorder %s17, 15
    %p117 = por %p115, %p116
    %p118 = scmp.ne.s32.totalorder %s109, %s110
    %p119 = scmp.eq.s32.totalorder %s17, 0
    %p120 = por %p118, %p119
    %p121 = scmp.ne.s32.totalorder %s109, %s110
    %p122 = scmp.eq.s32.totalorder %s18, 15
    %p123 = por %p121, %p122
    %p125 = scmp.ne.s32.totalorder %s110, %s124
    %p126 = scmp.eq.s32.totalorder %s18, 0
    %p127 = por %p125, %p126
    %s129 = sadd.s32 %s128, 1
    %p132 = scmp.eq.s32.totalorder %s12, 15
    %p133 = scmp.ne.s32.totalorder %s128, %s130
    %p134 = scmp.eq.s32.totalorder %s12, 0
    %p135 = por %p133, %p134
    %p136 = scmp.ne.s32.totalorder %s128, %s130
    %p137 = scmp.eq.s32.totalorder %s17, 15
    %p138 = por %p136, %p137
    %p139 = scmp.ne.s32.totalorder %s130, %s131
    %p140 = scmp.eq.s32.totalorder %s17, 0
    %p141 = por %p139, %p140
    %p142 = scmp.ne.s32.totalorder %s130, %s131
    %p143 = scmp.eq.s32.totalorder %s18, 15
    %p144 = por %p142, %p143
    %p146 = scmp.ne.s32.totalorder %s131, %s145
    %p147 = scmp.eq.s32.totalorder %s18, 0
    %p148 = por %p146, %p147
    %s150 = sadd.s32 %s149, 1
    %p153 = scmp.eq.s32.totalorder %s12, 15
    %p154 = scmp.ne.s32.totalorder %s149, %s151
    %p155 = scmp.eq.s32.totalorder %s12, 0
    %p156 = por %p154, %p155
    %p157 = scmp.ne.s32.totalorder %s149, %s151
    %p158 = scmp.eq.s32.totalorder %s17, 15
    %p159 = por %p157, %p158
    %p160 = scmp.ne.s32.totalorder %s151, %s152
    %p161 = scmp.eq.s32.totalorder %s17, 0
    %p162 = por %p160, %p161
    %p163 = scmp.ne.s32.totalorder %s151, %s152
    %p164 = scmp.eq.s32.totalorder %s18, 15
    %p165 = por %p163, %p164
    %p167 = scmp.ne.s32.totalorder %s152, %s166
    %p168 = scmp.eq.s32.totalorder %s18, 0
    %p169 = por %p167, %p168
    %s170 = sadd.s32 %s20, %s19
    %s171 = sadd.s32 %s27, %s31
    %s172 = ssub.s32 %s170, %s171
    %p173 = scmp.eq.s32.totalorder %s172, 0
    %s175 = sadd.s32 %s174, 1
    %s176 = scalar_select %p173, %s174, %s175
    %p179 = pneg %p173
    %p180 = scmp.eq.s32.totalorder %s12, 15
    %p181 = por %p179, %p180
    %p182 = scmp.ne.s32.totalorder %s174, %s177
    %p183 = scmp.eq.s32.totalorder %s12, 0
    %p184 = por %p182, %p183
    %p185 = scmp.ne.s32.totalorder %s174, %s177
    %p186 = scmp.eq.s32.totalorder %s17, 15
    %p187 = por %p185, %p186
    %p188 = scmp.ne.s32.totalorder %s177, %s178
    %p189 = scmp.eq.s32.totalorder %s17, 0
    %p190 = por %p188, %p189
    %p191 = scmp.ne.s32.totalorder %s177, %s178
    %p192 = scmp.eq.s32.totalorder %s18, 15
    %p193 = por %p191, %p192
    %p195 = scmp.ne.s32.totalorder %s178, %s194
    %p196 = scmp.eq.s32.totalorder %s18, 0
    %p197 = por %p195, %p196
    %p198 = scmp.le.s32.totalorder 1, %s12
    %p199 = scmp.lt.s32.totalorder %s12, 17
    %p200 = pnand %p198, %p199
    %p201 = pneg %p200
    // Predicated region
    $region9: #{generator2_forward.1} parent=5 // pred_check
      _
    $region10: #{generator2_forward.1} parent=5 // pred_check_branch
      %203 = sbr.rel (%p200) target = $region12
    $region11: #{generator2_forward.1} parent=5 // pred_region
      %s204 = ssub.s32 %s12, 1
      // Predicated region
      $region13: #{generator2_forward.1} parent=11 // pred_check
        %p205 = pneg %p50
      $region14: #{generator2_forward.1} parent=11 // pred_check_branch
        %207 = sbr.rel (%p205) target = $region16
      $region15: #{generator2_forward.1} parent=11 // pred_region
        %p208 = scmp.lt.s32.totalorder %s21, 0
        %s209 = scalar_select %p208, %s21, 0
        %s210 = smul.addr %s209, 8
        %s211 = scalar_lea.vmem %s0, %s210
      $region16: #{generator2_forward.1} parent=11 // pred_fallthru
        _
      // Predicated region
      $region17: #{generator2_forward.1} parent=11 // pred_check
        %p212 = pneg %p99
      $region18: #{generator2_forward.1} parent=11 // pred_check_branch
        %214 = sbr.rel (%p212) target = $region20
      $region19: #{generator2_forward.1} parent=11 // pred_region
        _
      $region20: #{generator2_forward.1} parent=11 // pred_fallthru
        _
      // Predicated region
      $region21: #{generator2_forward.1} parent=11 // pred_check
        %p215 = pneg %p120
      $region22: #{generator2_forward.1} parent=11 // pred_check_branch
        %217 = sbr.rel (%p215) target = $region24
      $region23: #{generator2_forward.1} parent=11 // pred_region
        _
      $region24: #{generator2_forward.1} parent=11 // pred_fallthru
        _
      // Predicated region
      $region25: #{generator2_forward.1} parent=11 // pred_check
        %p218 = pneg %p141
      $region26: #{generator2_forward.1} parent=11 // pred_check_branch
        %220 = sbr.rel (%p218) target = $region28
      $region27: #{generator2_forward.1} parent=11 // pred_region
        _
      $region28: #{generator2_forward.1} parent=11 // pred_fallthru
        _
      // Predicated region
      $region29: #{generator2_forward.1} parent=11 // pred_check
        %p221 = pneg %p162
      $region30: #{generator2_forward.1} parent=11 // pred_check_branch
        %223 = sbr.rel (%p221) target = $region32
      $region31: #{generator2_forward.1} parent=11 // pred_region
        _
      $region32: #{generator2_forward.1} parent=11 // pred_fallthru
        _
    $region12: #{generator2_forward.1} parent=5 // pred_fallthru
      _
    %p224 = scmp.lt.s32.totalorder %s12, 16
    // Predicated region
    $region33: #{generator2_forward.1} parent=5 // pred_check
      %p225 = pneg %p224
    $region34: #{generator2_forward.1} parent=5 // pred_check_branch
      %227 = sbr.rel (%p225) target = $region36
    $region35: #{generator2_forward.1} parent=5 // pred_region
      // Predicated region
      $region37: #{generator2_forward.1} parent=35 // pred_check
        %p228 = pneg %p72
      $region38: #{generator2_forward.1} parent=35 // pred_check_branch
        %230 = sbr.rel (%p228) target = $region40
      $region39: #{generator2_forward.1} parent=35 // pred_region
        %s231 = sadd.s32 %s20, %s19
        %p232 = scmp.lt.s32.totalorder %s231, 15
        %s233 = scalar_select %p232, %s231, 15
        %s234 = smul.addr %s233, 8
        %s235 = scalar_lea.vmem %s1, %s234
        %s236 = sadd.s32 %s20, %s19
      $region40: #{generator2_forward.1} parent=35 // pred_fallthru
        _
    $region36: #{generator2_forward.1} parent=5 // pred_fallthru
      _
    %p237 = scmp.le.s32.totalorder 1, %s12
    %p238 = scmp.lt.s32.totalorder %s12, 17
    %p239 = pnand %p237, %p238
    %p240 = pneg %p239
    // Predicated region
    $region41: #{generator2_forward.1} parent=5 // pred_check
      _
    $region42: #{generator2_forward.1} parent=5 // pred_check_branch
      %242 = sbr.rel (%p239) target = $region44
    $region43: #{generator2_forward.1} parent=5 // pred_region
      %s243 = ssub.s32 %s12, 1
      %p244 = scmp.lt.s32.totalorder %s21, 0
      %s245 = scalar_select %p244, %s21, 0
      %s246 = smul.addr %s245, 8
      %s247 = scalar_lea.vmem %s0, %s246
      %p248 = pneg %p50
      %p249 = pneg %p47
      %s250 = sadd.s32 %s22, %s21
      %p251 = scmp.lt.s32.totalorder %s250, 15
      %s252 = scalar_select %p251, %s250, 15
      %s253 = smul.addr %s252, 8
      %s254 = scalar_lea.vmem %s1, %s253
      %p255 = pneg %p78
      %p256 = pneg %p75
      %p257 = pneg %p99
      %p258 = pneg %p96
      %p259 = pneg %p120
      %p260 = pneg %p117
      %p261 = pneg %p141
      %p262 = pneg %p138
      %p263 = pneg %p162
      %p264 = pneg %p159
      %p265 = pneg %p190
      %p266 = pneg %p187
      %s267 = sadd.s32 %s22, %s21
      %p268 = scmp.lt.s32.totalorder %s267, 15
      %s269 = scalar_select %p268, %s267, 15
      %s270 = smul.addr %s269, 8
      %s271 = scalar_lea.vmem %s6, %s270
      %p272 = scmp.lt.s32.totalorder %s21, 0
      %s273 = scalar_select %p272, %s21, 0
      %s274 = smul.addr %s273, 8
      %s275 = scalar_lea.vmem %s0, %s274
      %s276 = sadd.s32 %s22, %s21
      %p277 = scmp.lt.s32.totalorder %s276, 15
      %s278 = scalar_select %p277, %s276, 15
      %s279 = smul.addr %s278, 8
      %s280 = scalar_lea.vmem %s1, %s279
      %s281 = sadd.s32 %s22, %s21
      %s282 = sadd.s32 %s22, %s21
      %p283 = scmp.lt.s32.totalorder %s282, 15
      %s284 = scalar_select %p283, %s282, 15
      %s285 = smul.addr %s284, 8
      %s286 = scalar_lea.vmem %s6, %s285
      %s287 = sadd.s32 %s22, %s21
      %p288 = scmp.eq.s32.totalorder %s22, 0
      // Predicated region
      $region45: #{generator2_forward.1} parent=43 // pred_check
        %p289 = pneg %p288
      $region46: #{generator2_forward.1} parent=43 // pred_check_branch
        %291 = sbr.rel (%p289) target = $region48
      $region47: #{generator2_forward.1} parent=43 // pred_region
        %v292 = vld [vmem:[%s275] sm:$0xff]
        %v293 = vld [vmem:[%s2] sm:$0xff]
        %v294 = vld [vmem:[%s2 + $0x8] sm:$0xff]
        %v295 = vld [vmem:[%s2 + $0x10] sm:$0xff]
        %v296 = vld [vmem:[%s2 + $0x18] sm:$0xff]
        %v297 = vld [vmem:[%s3] sm:$0x1]
        %v299 = vlaneseq
        %v300 = vshrl.u32 %v299, 7
        %v301 = vsub.s32 0, %v300
        %v302 = vrot.slane %v297, %v301
        %vm304 = vcmask 261120
        %v306 = vsel %vm304, %v292, 0
        %308 = vmatprep.subr.mxu0 0.0
        %309 = vmatpush1.msra.mxu0 0.0
        %310 = vmatprep.subr.mxu0 0.0
        %311 = vmatpush1.msra.mxu0 0.0
        %312 = vmatprep.subr.mxu0 0.0
        %313 = vmatpush1.msra.mxu0 0.0
        %314 = vmatprep.subr.mxu0 0.0
        %315 = vmatpush1.msra.mxu0 0.0
        %316 = vmatprep.subr.mxu0 0.0
        %317 = vmatpush1.msra.mxu0 0.0
        %318 = vmatprep.subr.mxu0 0.0
        %319 = vmatpush1.msra.mxu0 0.0
        %320 = vmatprep.subr.mxu0 0.0
        %321 = vmatpush1.msra.mxu0 0.0
        %322 = vmatprep.subr.mxu0 0.0
        %323 = vmatpush1.msra.mxu0 0.0
        %324 = vmatprep.subr.mxu0 0.0
        %325 = vmatpush1.msra.mxu0 0.0
        %326 = vmatprep.subr.mxu0 0.0
        %327 = vmatpush1.msra.mxu0 0.0
        %328 = vmatprep.subr.mxu0 0.0
        %329 = vmatpush1.msra.mxu0 0.0
        %330 = vmatprep.subr.mxu0 0.0
        %331 = vmatpush1.msra.mxu0 0.0
        %332 = vmatprep.subr.mxu0 0.0
        %333 = vmatpush1.msra.mxu0 %v296
        %334 = vmatprep.subr.mxu0 0.0
        %335 = vmatpush1.msra.mxu0 %v295
        %336 = vmatprep.subr.mxu0 0.0
        %337 = vmatpush1.msra.mxu0 %v294
        %338 = vmatprep.subr.mxu0 0.0
        %339 = vmatpush1.msra.mxu0 %v293
        %340 = vmatprep.subr.mxu0 0.0
        %341 = vmatpush2.msra.mxu0 0.0
        %342 = vmatprep.subr.mxu0 0.0
        %343 = vmatpush2.msra.mxu0 0.0
        %344 = vmatprep.subr.mxu0 0.0
        %345 = vmatpush2.msra.mxu0 0.0
        %346 = vmatprep.subr.mxu0 0.0
        %347 = vmatpush2.msra.mxu0 0.0
        %348 = vmatprep.subr.mxu0 0.0
        %349 = vmatpush2.msra.mxu0 0.0
        %350 = vmatprep.subr.mxu0 0.0
        %351 = vmatpush2.msra.mxu0 0.0
        %352 = vmatprep.subr.mxu0 0.0
        %353 = vmatpush2.msra.mxu0 0.0
        %354 = vmatprep.subr.mxu0 0.0
        %355 = vmatpush2.msra.mxu0 0.0
        %356 = vmatprep.subr.mxu0 0.0
        %357 = vmatpush2.msra.mxu0 0.0
        %358 = vmatprep.subr.mxu0 0.0
        %359 = vmatpush2.msra.mxu0 0.0
        %360 = vmatprep.subr.mxu0 0.0
        %361 = vmatpush2.msra.mxu0 0.0
        %362 = vmatprep.subr.mxu0 0.0
        %363 = vmatpush2.msra.mxu0 0.0
        %364 = vmatprep.subr.mxu0 0.0
        %365 = vmatpush2.msra.mxu0 0.0
        %366 = vmatprep.subr.mxu0 0.0
        %367 = vmatpush2.msra.mxu0 0.0
        %368 = vmatprep.subr.mxu0 0.0
        %369 = vmatpush2.msra.mxu0 0.0
        %370 = vmatprep.subr.mxu0 0.0
        %371 = vmatpush2.msra.mxu0 0.0
        %372 = vmatprep.mubr.f32.mxu0 0.0
        %373 = vmatmul.mubr.f32.gmra.mxu0 %v306
        %v374 = vpop.f32.mrf.mxu0
        %v375 = vadd.f32 %v302, %v374
        %v376 = vpop.f32.mrf.mxu0
        %377 = vdwg.mxu0
        %378 = vst.msk [vmem:[#allocation2] sm:$0xff] %vm304, %v375
        %v379 = vmax.f32 %v375, 0.0
        %381 = vrot.lane.b32.xlu0 %v379, 96
        %v382 = vpop.permute.xlu0 %381
        %384 = vst.msk [vmem:[#allocation3] sm:$0xff] %vm304, %v382
        %386 = vrot.lane.b32.xlu0 %v375, 64
        %v387 = vpop.permute.xlu0 %386
        %389 = vst.msk [vmem:[#allocation4] sm:$0xff] %vm304, %v387
      $region48: #{generator2_forward.1} parent=43 // pred_fallthru
        _
      %v390 = vld [vmem:[#allocation2] sm:$0xff]
      %v391 = vld [vmem:[#allocation3] sm:$0xff]
      %v392 = vld [vmem:[%s280] sm:$0xff]
      %v393 = vmul.f32 %v391, %v392
      %v394 = vadd.f32 %v390, %v393
      %v395 = vld [vmem:[#allocation4] sm:$0xff]
      %v396 = vld [vmem:[%s4] sm:$0xff]
      %v397 = vld [vmem:[%s4 + $0x8] sm:$0xff]
      %v398 = vld [vmem:[%s4 + $0x10] sm:$0xff]
      %v399 = vld [vmem:[%s4 + $0x18] sm:$0xff]
      %vm400 = vcmask 261120
      %v402 = vsel %vm400, %v394, 0
      %404 = vmatprep.subr.mxu0 0.0
      %405 = vmatpush1.msra.mxu0 0.0
      %406 = vmatprep.subr.mxu0 0.0
      %407 = vmatpush1.msra.mxu0 0.0
      %408 = vmatprep.subr.mxu0 0.0
      %409 = vmatpush1.msra.mxu0 0.0
      %410 = vmatprep.subr.mxu0 0.0
      %411 = vmatpush1.msra.mxu0 0.0
      %412 = vmatprep.subr.mxu0 0.0
      %413 = vmatpush1.msra.mxu0 0.0
      %414 = vmatprep.subr.mxu0 0.0
      %415 = vmatpush1.msra.mxu0 0.0
      %416 = vmatprep.subr.mxu0 0.0
      %417 = vmatpush1.msra.mxu0 0.0
      %418 = vmatprep.subr.mxu0 0.0
      %419 = vmatpush1.msra.mxu0 0.0
      %420 = vmatprep.subr.mxu0 0.0
      %421 = vmatpush1.msra.mxu0 0.0
      %422 = vmatprep.subr.mxu0 0.0
      %423 = vmatpush1.msra.mxu0 0.0
      %424 = vmatprep.subr.mxu0 0.0
      %425 = vmatpush1.msra.mxu0 0.0
      %426 = vmatprep.subr.mxu0 0.0
      %427 = vmatpush1.msra.mxu0 0.0
      %428 = vmatprep.subr.mxu0 0.0
      %429 = vmatpush1.msra.mxu0 %v399
      %430 = vmatprep.subr.mxu0 0.0
      %431 = vmatpush1.msra.mxu0 %v398
      %432 = vmatprep.subr.mxu0 0.0
      %433 = vmatpush1.msra.mxu0 %v397
      %434 = vmatprep.subr.mxu0 0.0
      %435 = vmatpush1.msra.mxu0 %v396
      %436 = vmatprep.subr.mxu0 0.0
      %437 = vmatpush2.msra.mxu0 0.0
      %438 = vmatprep.subr.mxu0 0.0
      %439 = vmatpush2.msra.mxu0 0.0
      %440 = vmatprep.subr.mxu0 0.0
      %441 = vmatpush2.msra.mxu0 0.0
      %442 = vmatprep.subr.mxu0 0.0
      %443 = vmatpush2.msra.mxu0 0.0
      %444 = vmatprep.subr.mxu0 0.0
      %445 = vmatpush2.msra.mxu0 0.0
      %446 = vmatprep.subr.mxu0 0.0
      %447 = vmatpush2.msra.mxu0 0.0
      %448 = vmatprep.subr.mxu0 0.0
      %449 = vmatpush2.msra.mxu0 0.0
      %450 = vmatprep.subr.mxu0 0.0
      %451 = vmatpush2.msra.mxu0 0.0
      %452 = vmatprep.subr.mxu0 0.0
      %453 = vmatpush2.msra.mxu0 0.0
      %454 = vmatprep.subr.mxu0 0.0
      %455 = vmatpush2.msra.mxu0 0.0
      %456 = vmatprep.subr.mxu0 0.0
      %457 = vmatpush2.msra.mxu0 0.0
      %458 = vmatprep.subr.mxu0 0.0
      %459 = vmatpush2.msra.mxu0 0.0
      %460 = vmatprep.subr.mxu0 0.0
      %461 = vmatpush2.msra.mxu0 0.0
      %462 = vmatprep.subr.mxu0 0.0
      %463 = vmatpush2.msra.mxu0 0.0
      %464 = vmatprep.subr.mxu0 0.0
      %465 = vmatpush2.msra.mxu0 0.0
      %466 = vmatprep.subr.mxu0 0.0
      %467 = vmatpush2.msra.mxu0 0.0
      %468 = vmatprep.mubr.f32.mxu0 0.0
      %469 = vmatmul.mubr.f32.gmra.mxu0 %v402
      %v470 = vpop.f32.mrf.mxu0
      %v471 = vadd.f32 0.0, %v470
      %v472 = vpop.f32.mrf.mxu0
      %473 = vdwg.mxu0
      %v474 = vadd.f32 %v395, %v471
      %v475 = vmax.f32 %v474, 0.0
      %v476 = vld [vmem:[%s5] sm:$0xff]
      %v477 = vld [vmem:[%s5 + $0x8] sm:$0xff]
      %v478 = vld [vmem:[%s5 + $0x10] sm:$0xff]
      %v479 = vld [vmem:[%s5 + $0x18] sm:$0xff]
      %v481 = vsel %vm400, %v475, 0
      %483 = vmatprep.subr.mxu0 0.0
      %484 = vmatpush1.msra.mxu0 0.0
      %485 = vmatprep.subr.mxu0 0.0
      %486 = vmatpush1.msra.mxu0 0.0
      %487 = vmatprep.subr.mxu0 0.0
      %488 = vmatpush1.msra.mxu0 0.0
      %489 = vmatprep.subr.mxu0 0.0
      %490 = vmatpush1.msra.mxu0 0.0
      %491 = vmatprep.subr.mxu0 0.0
      %492 = vmatpush1.msra.mxu0 0.0
      %493 = vmatprep.subr.mxu0 0.0
      %494 = vmatpush1.msra.mxu0 0.0
      %495 = vmatprep.subr.mxu0 0.0
      %496 = vmatpush1.msra.mxu0 0.0
      %497 = vmatprep.subr.mxu0 0.0
      %498 = vmatpush1.msra.mxu0 0.0
      %499 = vmatprep.subr.mxu0 0.0
      %500 = vmatpush1.msra.mxu0 0.0
      %501 = vmatprep.subr.mxu0 0.0
      %502 = vmatpush1.msra.mxu0 0.0
      %503 = vmatprep.subr.mxu0 0.0
      %504 = vmatpush1.msra.mxu0 0.0
      %505 = vmatprep.subr.mxu0 0.0
      %506 = vmatpush1.msra.mxu0 0.0
      %507 = vmatprep.subr.mxu0 0.0
      %508 = vmatpush1.msra.mxu0 %v479
      %509 = vmatprep.subr.mxu0 0.0
      %510 = vmatpush1.msra.mxu0 %v478
      %511 = vmatprep.subr.mxu0 0.0
      %512 = vmatpush1.msra.mxu0 %v477
      %513 = vmatprep.subr.mxu0 0.0
      %514 = vmatpush1.msra.mxu0 %v476
      %515 = vmatprep.subr.mxu0 0.0
      %516 = vmatpush2.msra.mxu0 0.0
      %517 = vmatprep.subr.mxu0 0.0
      %518 = vmatpush2.msra.mxu0 0.0
      %519 = vmatprep.subr.mxu0 0.0
      %520 = vmatpush2.msra.mxu0 0.0
      %521 = vmatprep.subr.mxu0 0.0
      %522 = vmatpush2.msra.mxu0 0.0
      %523 = vmatprep.subr.mxu0 0.0
      %524 = vmatpush2.msra.mxu0 0.0
      %525 = vmatprep.subr.mxu0 0.0
      %526 = vmatpush2.msra.mxu0 0.0
      %527 = vmatprep.subr.mxu0 0.0
      %528 = vmatpush2.msra.mxu0 0.0
      %529 = vmatprep.subr.mxu0 0.0
      %530 = vmatpush2.msra.mxu0 0.0
      %531 = vmatprep.subr.mxu0 0.0
      %532 = vmatpush2.msra.mxu0 0.0
      %533 = vmatprep.subr.mxu0 0.0
      %534 = vmatpush2.msra.mxu0 0.0
      %535 = vmatprep.subr.mxu0 0.0
      %536 = vmatpush2.msra.mxu0 0.0
      %537 = vmatprep.subr.mxu0 0.0
      %538 = vmatpush2.msra.mxu0 0.0
      %539 = vmatprep.subr.mxu0 0.0
      %540 = vmatpush2.msra.mxu0 0.0
      %541 = vmatprep.subr.mxu0 0.0
      %542 = vmatpush2.msra.mxu0 0.0
      %543 = vmatprep.subr.mxu0 0.0
      %544 = vmatpush2.msra.mxu0 0.0
      %545 = vmatprep.subr.mxu0 0.0
      %546 = vmatpush2.msra.mxu0 0.0
      %547 = vmatprep.mubr.f32.mxu0 0.0
      %548 = vmatmul.mubr.f32.gmra.mxu0 %v481
      %v549 = vpop.f32.mrf.mxu0
      %v550 = vadd.f32 0.0, %v549
      %v551 = vpop.f32.mrf.mxu0
      %552 = vdwg.mxu0
      %v553 = vmax.f32 %v550, 0.0
      %554 = vst.msk [vmem:[%s286] sm:$0xff] %vm400, %v553
      %s555 = sadd.s32 %s22, %s21
      %p556 = scmp.lt.s32.totalorder %s555, 15
      %s557 = scalar_select %p556, %s555, 15
      %s558 = smul.addr %s557, 8
      %s559 = scalar_lea.vmem %s6, %s558
      // Predicated region
      $region49: #{generator2_forward.1} parent=43 // pred_check
        %p560 = pneg %p187
      $region50: #{generator2_forward.1} parent=43 // pred_check_branch
        %562 = sbr.rel (%p560) target = $region52
      $region51: #{generator2_forward.1} parent=43 // pred_region
        %s563 = sadd.s32 %s22, %s21
      $region52: #{generator2_forward.1} parent=43 // pred_fallthru
        _
    $region44: #{generator2_forward.1} parent=5 // pred_fallthru
      _
    %p564 = scmp.le.s32.totalorder 2, %s12
    // Predicated region
    $region53: #{generator2_forward.1} parent=5 // pred_check
      %p565 = pneg %p564
    $region54: #{generator2_forward.1} parent=5 // pred_check_branch
      %567 = sbr.rel (%p565) target = $region56
    $region55: #{generator2_forward.1} parent=5 // pred_region
      %s568 = ssub.s32 %s12, 2
      // Predicated region
      $region57: #{generator2_forward.1} parent=55 // pred_check
        %p569 = pneg %p193
      $region58: #{generator2_forward.1} parent=55 // pred_check_branch
        %571 = sbr.rel (%p569) target = $region60
      $region59: #{generator2_forward.1} parent=55 // pred_region
        %s572 = sadd.s32 %s24, %s23
        %p573 = scmp.lt.s32.totalorder %s572, 15
        %s574 = scalar_select %p573, %s572, 15
        %s575 = smul.addr %s574, 8
        %s576 = scalar_lea.vmem %s6, %s575
      $region60: #{generator2_forward.1} parent=55 // pred_fallthru
        _
    $region56: #{generator2_forward.1} parent=5 // pred_fallthru
      _
  $region6: #{generator2_forward.1} parent=0 // loop_footer
    %s16 = sadd.s32 1, %s12
  $region7: #{generator2_forward.1} parent=0 // loop_footer_branch
    %11 = sbr.rel target = $region3
  $region8: #{generator2_forward.1} parent=0 // loop_exit
    _

</llo_original>
